<compile_context>
chip_gen: v5e
topology: v5e:2x2
jax: 0.10.0
libtpu: 0.0.40
codegen_flags: <defaults>
</compile_context>

<pallas_src>
import functools
import math

import jax
import jax.numpy as jnp
import numpy as np
from jax.experimental import pallas as pl
from jax.experimental.pallas import tpu as pltpu


_TARGET_BLOCK_BYTES = 2 << 20  # ~2 MiB blocks: ~85% of HBM roofline, small vs scoped VMEM.


@functools.lru_cache(maxsize=None)
def _restrict_mask_np(H, W, radius, flat):
    """Host-side (cached) mask construction; mirrors RestrictAttention.make()."""
    if flat:
        H = math.isqrt(H)  # robust equivalent of int(H ** 0.5) for perfect squares
        W = math.isqrt(W)
    gx, gy = np.meshgrid(np.arange(H), np.arange(W), indexing="ij")  # torch.meshgrid default 'ij'
    dx = gx[None, None, :, :] - gx[:, :, None, None]
    dy = gy[None, None, :, :] - gy[:, :, None, None]
    D = np.sqrt((dx * dx + dy * dy).astype(np.float32))
    D = (D < radius).astype(np.float32)
    if flat:
        # == torch.flatten(torch.flatten(D[None], 1, 2), -2, -1)[0]
        D = D.reshape(D.shape[0] * D.shape[1], D.shape[2] * D.shape[3])
    return D


def _mul_kernel(x_ref, m_ref, o_ref):
    # Pure VPU elementwise multiply; m_ref is (1, tn) (sublane-broadcast row) or (tl, tn).
    o_ref[...] = x_ref[...] * m_ref[...]


def _pick_tiles(L, N, itemsize):
    """Choose (tl, tn): ~2 MiB blocks, tl multiple of 8 (or == L), tn multiple of 128 (or == N)."""
    if N <= 128 or 8 * N * itemsize <= _TARGET_BLOCK_BYTES:
        tn = N  # full-width rows fit comfortably
    else:
        tn = max(128, (_TARGET_BLOCK_BYTES // (8 * itemsize) // 128) * 128)
        tn = min(tn, N)
    tl = _TARGET_BLOCK_BYTES // max(1, tn * itemsize)
    if tl >= L:
        tl = L  # single row-block covers everything (tiny-problem path)
    else:
        tl = max(8, (tl // 8) * 8)
    return tl, tn


def _pallas_masked_mul(x2d, m2d, *, mask_resident):
    """out[l, n] = x2d[l, n] * m2d[l or 0, n] via a tiled, lane-dense Pallas kernel."""
    L, N = x2d.shape
    itemsize = jnp.dtype(x2d.dtype).itemsize
    tl, tn = _pick_tiles(L, N, itemsize)
    grid = (pl.cdiv(L, tl), pl.cdiv(N, tn))

    x_spec = pl.BlockSpec((tl, tn), lambda i, j: (i, j))
    if mask_resident:
        # Mask row stays VMEM-resident across the row axis (constant block row).
        m_spec = pl.BlockSpec((1, tn), lambda i, j: (0, j))
    else:
        m_spec = pl.BlockSpec((tl, tn), lambda i, j: (i, j))

    cost = pl.CostEstimate(
        flops=int(L) * int(N),
        transcendentals=0,
        bytes_accessed=int((2 * int(L) * int(N) + int(m2d.size)) * itemsize),
    )

    return pl.pallas_call(
        _mul_kernel,
        out_shape=jax.ShapeDtypeStruct((L, N), x2d.dtype),
        grid=grid,
        in_specs=[x_spec, m_spec],
        out_specs=pl.BlockSpec((tl, tn), lambda i, j: (i, j)),
        compiler_params=pltpu.CompilerParams(
            dimension_semantics=("parallel", "parallel")),
        cost_estimate=cost,
    )(x2d, m2d)


def restrict_attention(x, radius, flat=True):
    """Forward pass of RestrictAttention: x * restriction_mask (broadcast over leading dims)."""
    H, W = x.shape[-2], x.shape[-1]
    mask = jnp.asarray(
        _restrict_mask_np(int(H), int(W), float(radius), bool(flat)), dtype=x.dtype
    )

    if x.size == 0:  # degenerate empty input: nothing to compute
        out_shape = jnp.broadcast_shapes(x.shape, mask.shape)
        return jnp.zeros(out_shape, dtype=x.dtype)

    if flat and mask.shape == (H, W):
        # Intended use: x is (..., N, N) with N = s*s; mask matches x's trailing 2 dims exactly
        # and broadcasts over all leading dims -> flatten trailing dims into the lane axis.
        lead = x.shape[:-2]
        L = int(math.prod(lead)) if lead else 1
        N = H * W
        g = 128 // math.gcd(N, 128)  # fold factor to make the lane axis a multiple of 128
        if g > 1 and L % g == 0:
            xf = x.reshape(L // g, g * N)                     # lane-dense folded view
            mrow = jnp.tile(mask.reshape(1, N), (1, g))       # mask period is N along lanes
        else:
            xf = x.reshape(L, N)
            mrow = mask.reshape(1, N)
        out = _pallas_masked_mul(xf, mrow, mask_resident=True)
        return out.reshape(*lead, H, W) if lead else out.reshape(H, W)

    # Generic path (flat=False, or non-square-spatial shapes): mirror PyTorch broadcasting of
    # `x * mask`, then run the elementwise multiply in Pallas on a lane-dense 2-D view.
    out_shape = jnp.broadcast_shapes(x.shape, mask.shape)
    last2 = out_shape[-2] * out_shape[-1]
    L = int(math.prod(out_shape[:-2])) if out_shape[:-2] else 1
    xb = x if x.shape == out_shape else jnp.broadcast_to(x, out_shape)
    mb = mask if mask.shape == out_shape else jnp.broadcast_to(mask, out_shape)
    out = _pallas_masked_mul(xb.reshape(L, last2), mb.reshape(L, last2), mask_resident=False)
    return out.reshape(out_shape)


if __name__ == "__main__":
    # Module has no learnable parameters; only hyperparameters (radius, flat).
    radius = 2.0

    key = jax.random.PRNGKey(0)
    k0, k1 = jax.random.split(key)

    # Fast path: x is (B, C, N, N) with N = 16 = 4*4 (flattened 4x4 spatial grid), flat=True.
    x = jax.random.normal(k0, (2, 4, 16, 16), dtype=jnp.float32)
    y = restrict_attention(x, radius, flat=True)
    y = jax.block_until_ready(y)
    ref = x * jnp.asarray(_restrict_mask_np(16, 16, radius, True), dtype=x.dtype)
    assert y.shape == x.shape and y.dtype == x.dtype
    assert jnp.array_equal(y, ref), "flat-path mismatch vs reference"

    # Generic path: flat=False with x shaped (H, W, H, W) so the 4-D mask multiplies directly.
    x2 = jax.random.normal(k1, (3, 3, 3, 3), dtype=jnp.float32)
    y2 = restrict_attention(x2, radius, flat=False)
    y2 = jax.block_until_ready(y2)
    ref2 = x2 * jnp.asarray(_restrict_mask_np(3, 3, radius, False), dtype=x2.dtype)
    assert y2.shape == ref2.shape and y2.dtype == x2.dtype
    assert jnp.array_equal(y2, ref2), "generic-path mismatch vs reference"

    print("KERNEL_OK")
</pallas_src>

<mosaic_0001>
module attributes {stable_mosaic.version = 11 : i64} {
  func.func @_mul_kernel(%arg0: i32, %arg1: i32, %arg2: memref<8x256xf32, #tpu.memory_space<vmem>>, %arg3: memref<1x256xf32, #tpu.memory_space<vmem>>, %arg4: memref<8x256xf32, #tpu.memory_space<vmem>>) attributes {dimension_semantics = [#tpu.dimension_semantics<parallel>, #tpu.dimension_semantics<parallel>], iteration_bounds = array<i64: 1, 1>, scalar_prefetch = 0 : i64, scratch_operands = 0 : i64, tpu.core_type = #tpu.core_type<tc>, window_params = [{transform_indices = @transform_0, window_bounds = array<i64: 8, 256>}, {transform_indices = @transform_1, window_bounds = array<i64: 1, 256>}, {transform_indices = @transform_2, window_bounds = array<i64: 8, 256>}]} {
    %c0 = arith.constant 0 : index
    %c0_0 = arith.constant 0 : index
    %0 = vector.load %arg2[%c0, %c0_0] : memref<8x256xf32, #tpu.memory_space<vmem>>, vector<8x256xf32>
    %c0_1 = arith.constant 0 : index
    %c0_2 = arith.constant 0 : index
    %1 = vector.load %arg3[%c0_1, %c0_2] : memref<1x256xf32, #tpu.memory_space<vmem>>, vector<1x256xf32>
    %2 = vector.broadcast %1 : vector<1x256xf32> to vector<8x256xf32>
    %3 = arith.mulf %0, %2 : vector<8x256xf32>
    %c0_3 = arith.constant 0 : index
    %c0_4 = arith.constant 0 : index
    %4 = vector.load %arg4[%c0_3, %c0_4] : memref<8x256xf32, #tpu.memory_space<vmem>>, vector<8x256xf32>
    tpu.vector_store %arg4[%c0_3, %c0_4], %3 {strides = array<i32>} : memref<8x256xf32, #tpu.memory_space<vmem>>, vector<8x256xf32>,
    return
  }
  func.func @transform_0(%arg0: i32, %arg1: i32) -> (i32, i32) {
    %c0_i32 = arith.constant 0 : i32
    return %arg0, %arg1 : i32, i32
  }
  func.func @transform_1(%arg0: i32, %arg1: i32) -> (i32, i32) {
    %c0_i32 = arith.constant 0 : i32
    %c0_i32_0 = arith.constant 0 : i32
    return %c0_i32, %arg1 : i32, i32
  }
  func.func @transform_2(%arg0: i32, %arg1: i32) -> (i32, i32) {
    %c0_i32 = arith.constant 0 : i32
    return %arg0, %arg1 : i32, i32
  }
}

</mosaic_0001>

<llo_original>
// kernel: tpu_custom_call.1
$region0: #{tpu_custom_call.1}
  #allocation0 [shape = 'u32[]', space=smem, size = 0x4, offset = 0x4, fixed_abs, tag = 'smem constant byte address 0x4 - core index']
  #allocation1 [shape = 'u32[72,128]{1,0:T(1,128)}', space=vmem, size = 0x9000, scoped, tag = 'internal scratch']
  %s0 = inlined_call_operand.hbm [shape: f32[8,256], index: 0, kind: input, shape index: {}]
  %s1 = inlined_call_operand.hbm [shape: f32[1,256], index: 1, kind: input, shape index: {}]
  %s2 = inlined_call_operand.hbm [shape: f32[8,256], index: 2, kind: output, shape index: {}]
  %s3 = sld [smem:[#allocation0]]
  $region26: #{tpu_custom_call.1} parent=0
    _
  %s5 = ssub.s32 1, %s3
  %s6 = scalar_select 0, %s5, %s3
  $region1: #{tpu_custom_call.1} parent=0
    #allocation2 [shape = 'u8[8192]{0}', space=vmem, size = 0x2000, scoped, tag = 'input window, operand 0, single buffered']
    #allocation3 [shape = 's32[1]{0}', space=sflag, size = 0x4, scoped, tag = 'scoped memory for tpu_custom_call.1']
    #allocation4 [shape = 's32[1]{0}', space=sflag, size = 0x4, scoped, tag = 'scoped memory for tpu_custom_call.1']
    #allocation5 [shape = 'u8[1024]{0}', space=vmem, size = 0x400, scoped, tag = 'input window, operand 1, single buffered']
    #allocation6 [shape = 's32[1]{0}', space=sflag, size = 0x4, scoped, tag = 'scoped memory for tpu_custom_call.1']
    #allocation7 [shape = 'u8[8192]{0}', space=vmem, size = 0x2000, scoped, tag = 'output window, operand 0, single buffered']
    %7 = vsyncpa [#allocation3], 0
    %8 = vsyncpa [#allocation6], 0
    %9 = vsyncpa [#allocation4], 0
    // Predicated region
    $region2: #{tpu_custom_call.1} parent=1 // pred_check
      _
    $region3: #{tpu_custom_call.1} parent=1 // pred_check_branch
      %11 = sbr.rel (0) target = $region5
    $region4: #{tpu_custom_call.1} parent=1 // pred_region
      %13 = vsyncadd [#allocation3], 0
      %s15 = sshll.u32 %s0, 4
      %s16 = int_to_ptr.hbm [resolvable:$true] %s15
      %s17 = sshll.u32 [#allocation2], 4
      %s18 = int_to_ptr.vmem [resolvable:$true] %s17
      %20 = dma.hbm_to_vmem [thread:$0]  %s16, 256, %s18, [#allocation3]
    $region5: #{tpu_custom_call.1} parent=1 // pred_fallthru
      _
    // Predicated region
    $region6: #{tpu_custom_call.1} parent=1 // pred_check
      _
    $region7: #{tpu_custom_call.1} parent=1 // pred_check_branch
      %22 = sbr.rel (0) target = $region9
    $region8: #{tpu_custom_call.1} parent=1 // pred_region
      %24 = vsyncadd [#allocation6], 0
      %s26 = sshll.u32 %s1, 4
      %s27 = int_to_ptr.hbm [resolvable:$true] %s26
      %s28 = sshll.u32 [#allocation5], 4
      %s29 = int_to_ptr.vmem [resolvable:$true] %s28
      %31 = dma.hbm_to_vmem [thread:$0]  %s27, 32, %s29, [#allocation6]
    $region9: #{tpu_custom_call.1} parent=1 // pred_fallthru
      _
    // Predicated region
    $region10: #{tpu_custom_call.1} parent=1 // pred_check
      _
    $region11: #{tpu_custom_call.1} parent=1 // pred_check_branch
      %33 = sbr.rel (0) target = $region13
    $region12: #{tpu_custom_call.1} parent=1 // pred_region
      %35 = dma.done [#allocation3], 256
    $region13: #{tpu_custom_call.1} parent=1 // pred_fallthru
      _
    // Predicated region
    $region14: #{tpu_custom_call.1} parent=1 // pred_check
      _
    $region15: #{tpu_custom_call.1} parent=1 // pred_check_branch
      %37 = sbr.rel (0) target = $region17
    $region16: #{tpu_custom_call.1} parent=1 // pred_region
      %39 = dma.done [#allocation6], 32
    $region17: #{tpu_custom_call.1} parent=1 // pred_fallthru
      _
    %v40 = vld [vmem:[#allocation2] sm:$0xff]
    %v41 = vld [vmem:[#allocation2 + $0x8] sm:$0xff]
    %v42 = vld [vmem:[#allocation5] sm:$0x3]
    %v44 = vperm.slane %v42, 0
    %v45 = vperm.slane %v42, 1
    %v48 = vmul.f32 %v40, %v44
    %v49 = vmul.f32 %v41, %v45
    %50 = vst [vmem:[#allocation7] sm:$0xff] %v48
    %51 = vst [vmem:[#allocation7 + $0x8] sm:$0xff] %v49
    // Predicated region
    $region18: #{tpu_custom_call.1} parent=1 // pred_check
      _
    $region19: #{tpu_custom_call.1} parent=1 // pred_check_branch
      %53 = sbr.rel (0) target = $region21
    $region20: #{tpu_custom_call.1} parent=1 // pred_region
      %55 = vsyncadd [#allocation4], 0
      %s57 = sshll.u32 [#allocation7], 4
      %s58 = int_to_ptr.vmem [resolvable:$true] %s57
      %s59 = sshll.u32 %s2, 4
      %s60 = int_to_ptr.hbm [resolvable:$true] %s59
      %62 = dma.vmem_to_hbm [thread:$0]  %s58, 256, %s60, [#allocation4]
    $region21: #{tpu_custom_call.1} parent=1 // pred_fallthru
      _
    // Predicated region
    $region22: #{tpu_custom_call.1} parent=1 // pred_check
      _
    $region23: #{tpu_custom_call.1} parent=1 // pred_check_branch
      %64 = sbr.rel (0) target = $region25
    $region24: #{tpu_custom_call.1} parent=1 // pred_region
      %66 = dma.done [#allocation4], 256
    $region25: #{tpu_custom_call.1} parent=1 // pred_fallthru
      _
    %67 = vsyncpa [#allocation3], 1
    %68 = vsyncpa [#allocation6], 1
    %69 = vsyncpa [#allocation4], 1

</llo_original>
